<compile_context>
chip_gen: v7x
topology: tpu7x:2x2x1
jax: 0.10.0
libtpu: 0.0.40
codegen_flags: <defaults>
</compile_context>

<pallas_src>
import jax
import jax.numpy as jnp
from jax.experimental import pallas as pl
from jax.experimental.pallas import tpu as pltpu

# ------------------------- synthetic configuration ---------------------------
V    = 16   # vocab_size
NF   = 32   # config.nfilters
K    = 3    # config.dist_filter_size (fc2 in_features identity needs K == 3)
POOL = 3    # config.pool_size
LQ   = 8    # query length
LD   = 20   # config.max_doc_length
B    = 2    # queries per batch
D    = 4    # clicked docs per query

LOQ = LQ - K + 1             # conv output length (query)
LOD = LD - K + 1             # conv output length (doc)
LP  = LD - POOL - 1          # fc2 in_features
assert LP == LOD - POOL + 1  # holds because K == 3


# ------------------------------ fused Pallas kernel ---------------------------
def _make_fused_kernel(Bq, Dd, Lq, Ld, nf, k, pool):
    N = Bq * Dd
    loq = Lq - k + 1           # valid conv positions per query
    lod = Ld - k + 1           # valid conv positions per doc
    lp = Ld - pool - 1         # fc2 in_features (module definition)

    # Static invariants that make the wrap-around rows of the shared roll-based
    # im2col and the stride-1 maxpool harmless:
    #   (a) the query max-pool only reads conv rows [b*Lq, b*Lq + loq), whose
    #       im2col taps stay inside query b (always true given loq = Lq-k+1);
    #   (b) every pooled doc row with time index >= lp gets a zero fc2 weight
    #       (seg_w2 rows are zero-padded past lp), and every pooled row < lp
    #       only touches valid conv rows (< lod)  =>  lp + pool - 1 <= lod.
    # A config change (K, POOL, LD) that breaks these fails loudly here.
    assert k == 3, "fc2 in_features == LD - POOL - 1 matches pooled length only for K == 3"
    assert lp == lod - pool + 1
    assert lp + pool - 1 <= lod
    assert loq >= 1 and lod >= 1

    def roll_up(x, j):
        # result[r] = x[(r + j) % rows]; wrapped / cross-item rows are ignored
        # downstream (valid-row slicing on the query path, zero fc2 weight on
        # the doc path), so only in-segment rows have to be correct.
        return x if j == 0 else pltpu.roll(x, x.shape[0] - j, 0)

    def kernel(q_ref, d_ref, wc_ref, bc_ref, w1_ref, b1_ref, exp_ref,
               wd_ref, bd_ref, w2seg_ref, b2_ref, w3_ref, b3_ref,
               w4_ref, b4_ref, out_ref):

        def mxu(act, w_bf16):
            # Weights are pre-cast to bf16 on the host; cast the activation
            # side only, accumulate in f32.
            return jnp.dot(act.astype(jnp.bfloat16), w_bf16,
                           preferred_element_type=jnp.float32)

        # ---- shared Conv1d: all queries + all docs in ONE im2col matmul -----
        rows = jnp.concatenate([q_ref[...], d_ref[...]], axis=0)    # (B*LQ + N*LD, V)
        cols = jnp.concatenate([roll_up(rows, j) for j in range(k)], axis=1)   # (R, K*V)
        conv_all = jnp.tanh(mxu(cols, wc_ref[...]) + bc_ref[...])   # (R, NF)
        conv_q = conv_all[:Bq * Lq, :]                              # (B*LQ, NF)
        conv_d = conv_all[Bq * Lq:, :]                              # (N*LD, NF)

        # ---- query path ------------------------------------------------------
        maxq = jnp.concatenate(
            [jnp.max(conv_q[b * Lq:b * Lq + loq, :], axis=0, keepdims=True)
             for b in range(Bq)], axis=0)                           # (B, NF)
        qrep = jnp.tanh(mxu(maxq, w1_ref[...]) + b1_ref[...])       # (B, NF)
        # replicate each query row to its D doc rows on the MXU (f32 one-hot,
        # exact copy); no sublane broadcast/concat on the XLU/VPU.
        qrep_n = jnp.dot(exp_ref[...], qrep,
                         preferred_element_type=jnp.float32)        # (N, NF)

        # ---- doc path --------------------------------------------------------
        pooled = conv_d                                             # max_pool1d(pool, stride=1)
        for p in range(1, pool):
            pooled = jnp.maximum(pooled, roll_up(conv_d, p))
        doc_rep = jnp.tanh(mxu(pooled, wd_ref[...]) + bd_ref[...])  # (N*LD, NF)

        # fc2 over the lp pooled positions of each doc: ONE segmented MXU matmul
        # against the precomputed block-diagonal bf16 weight (zero past lp).
        docsum = jnp.dot(w2seg_ref[...], doc_rep.astype(jnp.bfloat16),
                         preferred_element_type=jnp.float32)        # (N, NF)

        mapped = jnp.tanh(docsum * qrep_n + b2_ref[0])              # (N, NF)
        h3 = jnp.tanh(mxu(mapped, w3_ref[...]) + b3_ref[...])       # (N, NF)
        # TODO(synk): nn.Dropout treated as identity (eval mode); no RNG mask applied.
        score = jnp.tanh(mxu(h3, w4_ref[...]) + b4_ref[0])          # (N, 1)
        out_ref[...] = score                                        # single store for all N scores

    return kernel


# ------------------------------ wrapper (glue) --------------------------------
def distributed_model_forward(queries, clicks, params, *, pool_size=POOL):
    (wc, bc, w1, b1, expand, wd, bd, seg_w2, b2, w3, b3, w4, b4) = params
    Bq, Lq, Vq = queries.shape
    _, Dd, Ld, _ = clicks.shape
    N = Bq * Dd
    nf = w1.shape[0]
    k = wc.shape[0] // Vq

    # layout plumbing only: flatten items onto the sublane axis (free reshapes)
    q_flat = queries.reshape(Bq * Lq, Vq).astype(jnp.float32)
    d_flat = clicks.reshape(N * Ld, Vq).astype(jnp.float32)

    kernel = _make_fused_kernel(Bq, Dd, Lq, Ld, nf, k, pool_size)
    vmem = pl.BlockSpec(memory_space=pltpu.MemorySpace.VMEM)
    smem = pl.BlockSpec(memory_space=pltpu.MemorySpace.SMEM)

    score = pl.pallas_call(
        kernel,
        out_shape=jax.ShapeDtypeStruct((N, 1), jnp.float32),
        in_specs=[
            vmem, vmem,          # q_flat, d_flat
            vmem, vmem,          # wc (bf16), bc
            vmem, vmem,          # w1 (bf16), b1
            vmem,                # expand one-hot (N, B)
            vmem, vmem,          # wd (bf16), bd
            vmem,                # seg_w2 (bf16, block-diagonal)
            smem,                # b2 scalar
            vmem, vmem,          # w3 (bf16), b3
            vmem, smem,          # w4 (bf16), b4 scalar
        ],
        out_specs=vmem,
    )(q_flat, d_flat, wc, bc, w1, b1, expand, wd, bd, seg_w2, b2, w3, b3, w4, b4)
    return score.reshape(Bq, Dd)


# --------------------------- pure-JAX reference --------------------------------
def reference_forward(queries, clicks, torch_params, *, pool_size=POOL):
    (conv_w, conv_b, fc1_w, fc1_b, convd_w, convd_b,
     fc2_w, fc2_b, fc3_w, fc3_b, fc4_w, fc4_b) = torch_params
    Bq, Lq, Vq = queries.shape
    _, Dd, Ld, _ = clicks.shape
    N = Bq * Dd
    kk = conv_w.shape[2]
    nf = conv_w.shape[0]

    def conv_tanh(x):
        Lo = x.shape[1] - kk + 1
        acc = jnp.zeros((x.shape[0], Lo, nf), jnp.float32)
        for j in range(kk):
            acc = acc + jnp.einsum("nlv,fv->nlf", x[:, j:j + Lo, :], conv_w[:, :, j])
        return jnp.tanh(acc + conv_b)

    cq = conv_tanh(queries.astype(jnp.float32))                     # (B, LOQ, NF)
    qrep = jnp.tanh(jnp.max(cq, axis=1) @ fc1_w.T + fc1_b)          # (B, NF)

    xd = clicks.reshape(N, Ld, Vq).astype(jnp.float32)
    cd = conv_tanh(xd)                                              # (N, LOD, NF)
    lp = cd.shape[1] - pool_size + 1
    pooled = cd[:, :lp, :]
    for p in range(1, pool_size):
        pooled = jnp.maximum(pooled, cd[:, p:p + lp, :])            # (N, LP, NF)
    drep = jnp.tanh(jnp.einsum("ntf,gf->ntg", pooled, convd_w[:, :, 0]) + convd_b)

    qexp = jnp.repeat(qrep, Dd, axis=0)                             # (N, NF)
    sim = drep * qexp[:, None, :]                                   # (N, LP, NF)
    mapped = jnp.tanh(jnp.einsum("ntg,t->ng", sim, fc2_w[0]) + fc2_b[0])
    h3 = jnp.tanh(mapped @ fc3_w.T + fc3_b)                         # (N, NF)  (dropout = identity)
    score = jnp.tanh(h3 @ fc4_w.T + fc4_b)                          # (N, 1)
    return score.reshape(Bq, Dd)


# ------------------------------------ main -------------------------------------
if __name__ == "__main__":
    key = jax.random.PRNGKey(0)
    keys = jax.random.split(key, 16)
    s = 0.1

    # PyTorch-layout parameters (shapes as in DistributedModel.__init__).
    conv_w  = s * jax.random.normal(keys[0],  (NF, V, K),  jnp.float32)   # Conv1d(V, NF, K)
    conv_b  = s * jax.random.normal(keys[1],  (NF,),       jnp.float32)
    fc1_w   = s * jax.random.normal(keys[2],  (NF, NF),    jnp.float32)   # Linear(NF, NF)
    fc1_b   = s * jax.random.normal(keys[3],  (NF,),       jnp.float32)
    convd_w = s * jax.random.normal(keys[4],  (NF, NF, 1), jnp.float32)   # Conv1d(NF, NF, 1)
    convd_b = s * jax.random.normal(keys[5],  (NF,),       jnp.float32)
    fc2_w   = s * jax.random.normal(keys[6],  (1, LP),     jnp.float32)   # Linear(LP, 1)
    fc2_b   = s * jax.random.normal(keys[7],  (1,),        jnp.float32)
    fc3_w   = s * jax.random.normal(keys[8],  (NF, NF),    jnp.float32)   # Linear(NF, NF)
    fc3_b   = s * jax.random.normal(keys[9],  (NF,),       jnp.float32)
    fc4_w   = s * jax.random.normal(keys[10], (1, NF),     jnp.float32)   # Linear(NF, 1)
    fc4_b   = s * jax.random.normal(keys[11], (1,),        jnp.float32)

    torch_params = (conv_w, conv_b, fc1_w, fc1_b, convd_w, convd_b,
                    fc2_w, fc2_b, fc3_w, fc3_b, fc4_w, fc4_b)

    # ---------------- one-time host precompute of kernel-layout params --------
    N = B * D
    # fc2 weight row zero-padded to LD (lane-dense), laid out block-diagonally:
    # seg_w2[n, n*LD + t] = fc2_w[0, t] for t < LP, else 0.  Stored in bf16.
    w2_pad = jnp.concatenate([fc2_w, jnp.zeros((1, LD - LP), jnp.float32)], axis=1)  # (1, LD)
    seg_w2 = jnp.kron(jnp.eye(N, dtype=jnp.float32), w2_pad).astype(jnp.bfloat16)    # (N, N*LD)
    # (N, B) one-hot expansion: expand[n, b] = 1 iff n // D == b  (f32 -> exact copy on MXU)
    expand = jnp.repeat(jnp.eye(B, dtype=jnp.float32), D, axis=0)                    # (N, B)

    params = (
        jnp.transpose(conv_w, (2, 1, 0)).reshape(K * V, NF).astype(jnp.bfloat16),  # wc: tap-major, channel-minor
        conv_b[None, :],                                        # bc: (1, NF) f32
        fc1_w.T.astype(jnp.bfloat16), fc1_b[None, :],           # w1 bf16, b1 (1, NF)
        expand,                                                 # (N, B) f32
        convd_w[:, :, 0].T.astype(jnp.bfloat16), convd_b[None, :],   # wd bf16, bd (1, NF)
        seg_w2,                                                 # (N, N*LD) bf16 block-diagonal
        fc2_b.reshape(1),                                       # b2: (1,) f32 scalar (SMEM)
        fc3_w.T.astype(jnp.bfloat16), fc3_b[None, :],           # w3 bf16, b3 (1, NF)
        fc4_w.T.astype(jnp.bfloat16), fc4_b.reshape(1),         # w4 bf16 (NF,1), b4 (1,) (SMEM)
    )

    batch_queries = jax.random.normal(keys[12], (B, LQ, V), jnp.float32)
    batch_clicks  = jax.random.normal(keys[13], (B, D, LD, V), jnp.float32)

    fwd = jax.jit(distributed_model_forward)
    score = jax.block_until_ready(fwd(batch_queries, batch_clicks, params))
    assert score.shape == (B, D), score.shape

    ref = reference_forward(batch_queries, batch_clicks, torch_params)
    assert jnp.allclose(score, ref, atol=2e-2, rtol=2e-2), (score, ref)

    print("KERNEL_OK")
</pallas_src>

<mosaic_0001>
module attributes {stable_mosaic.version = 11 : i64} {
  func.func @kernel(%arg0: memref<16x16xf32, #tpu.memory_space<vmem>>, %arg1: memref<160x16xf32, #tpu.memory_space<vmem>>, %arg2: memref<48x32xbf16, #tpu.memory_space<vmem>>, %arg3: memref<1x32xf32, #tpu.memory_space<vmem>>, %arg4: memref<32x32xbf16, #tpu.memory_space<vmem>>, %arg5: memref<1x32xf32, #tpu.memory_space<vmem>>, %arg6: memref<8x2xf32, #tpu.memory_space<vmem>>, %arg7: memref<32x32xbf16, #tpu.memory_space<vmem>>, %arg8: memref<1x32xf32, #tpu.memory_space<vmem>>, %arg9: memref<8x160xbf16, #tpu.memory_space<vmem>>, %arg10: memref<1xf32, #tpu.memory_space<smem>>, %arg11: memref<32x32xbf16, #tpu.memory_space<vmem>>, %arg12: memref<1x32xf32, #tpu.memory_space<vmem>>, %arg13: memref<32x1xbf16, #tpu.memory_space<vmem>>, %arg14: memref<1xf32, #tpu.memory_space<smem>>, %arg15: memref<8x1xf32, #tpu.memory_space<vmem>>) attributes {dimension_semantics = [], scalar_prefetch = 0 : i64, scratch_operands = 0 : i64, tpu.core_type = #tpu.core_type<tc>} {
    %c0 = arith.constant 0 : index
    %c0_0 = arith.constant 0 : index
    %0 = vector.load %arg0[%c0, %c0_0] : memref<16x16xf32, #tpu.memory_space<vmem>>, vector<16x16xf32>
    %c0_1 = arith.constant 0 : index
    %c0_2 = arith.constant 0 : index
    %1 = vector.load %arg1[%c0_1, %c0_2] : memref<160x16xf32, #tpu.memory_space<vmem>>, vector<160x16xf32>
    %2 = tpu.concatenate %0, %1 in 0 : vector<16x16xf32>, vector<160x16xf32> -> vector<176x16xf32>
    %c175_i32 = arith.constant 175 : i32
    %3 = tpu.dynamic_rotate %2 by %c175_i32 dim 0 : vector<176x16xf32>, i32 -> vector<176x16xf32>
    %c174_i32 = arith.constant 174 : i32
    %4 = tpu.dynamic_rotate %2 by %c174_i32 dim 0 : vector<176x16xf32>, i32 -> vector<176x16xf32>
    %5 = tpu.concatenate %2, %3, %4 in 1 : vector<176x16xf32>, vector<176x16xf32>, vector<176x16xf32> -> vector<176x48xf32>
    %c0_3 = arith.constant 0 : index
    %c0_4 = arith.constant 0 : index
    %6 = vector.load %arg2[%c0_3, %c0_4] : memref<48x32xbf16, #tpu.memory_space<vmem>>, vector<48x32xbf16>
    %7 = arith.truncf %5 : vector<176x48xf32> to vector<176x48xbf16>
    %cst = arith.constant dense<0.000000e+00> : vector<176x32xf32>
    %8 = tpu.matmul %7, %6, %cst {dimension_numbers = #tpu.dot_dimension_numbers<[1], [0], [0], [1], [0, 0, 1, 1], [], []>} : vector<176x48xbf16>, vector<48x32xbf16>, vector<176x32xf32> -> vector<176x32xf32>
    %c0_5 = arith.constant 0 : index
    %c0_6 = arith.constant 0 : index
    %9 = vector.load %arg3[%c0_5, %c0_6] : memref<1x32xf32, #tpu.memory_space<vmem>>, vector<1x32xf32>
    %10 = vector.broadcast %9 : vector<1x32xf32> to vector<176x32xf32>
    %11 = arith.addf %8, %10 : vector<176x32xf32>
    %12 = math.tanh %11 : vector<176x32xf32>
    %13 = vector.extract_strided_slice %12 {offsets = [0, 0], sizes = [16, 32], strides = [1, 1]} : vector<176x32xf32> to vector<16x32xf32>
    %14 = vector.extract_strided_slice %12 {offsets = [16, 0], sizes = [160, 32], strides = [1, 1]} : vector<176x32xf32> to vector<160x32xf32>
    %15 = vector.extract_strided_slice %13 {offsets = [0, 0], sizes = [6, 32], strides = [1, 1]} : vector<16x32xf32> to vector<6x32xf32>
    %cst_7 = arith.constant dense<0xFF800000> : vector<32xf32>
    %16 = vector.multi_reduction <maximumf>, %15, %cst_7 [0] : vector<6x32xf32> to vector<32xf32>
    %17 = vector.shape_cast %16 : vector<32xf32> to vector<1x32xf32>
    %18 = vector.extract_strided_slice %13 {offsets = [8, 0], sizes = [6, 32], strides = [1, 1]} : vector<16x32xf32> to vector<6x32xf32>
    %cst_8 = arith.constant dense<0xFF800000> : vector<32xf32>
    %19 = vector.multi_reduction <maximumf>, %18, %cst_8 [0] : vector<6x32xf32> to vector<32xf32>
    %20 = vector.shape_cast %19 : vector<32xf32> to vector<1x32xf32>
    %21 = tpu.concatenate %17, %20 in 0 : vector<1x32xf32>, vector<1x32xf32> -> vector<2x32xf32>
    %c0_9 = arith.constant 0 : index
    %c0_10 = arith.constant 0 : index
    %22 = vector.load %arg4[%c0_9, %c0_10] : memref<32x32xbf16, #tpu.memory_space<vmem>>, vector<32x32xbf16>
    %23 = arith.truncf %21 : vector<2x32xf32> to vector<2x32xbf16>
    %cst_11 = arith.constant dense<0.000000e+00> : vector<2x32xf32>
    %24 = tpu.matmul %23, %22, %cst_11 {dimension_numbers = #tpu.dot_dimension_numbers<[1], [0], [0], [1], [0, 0, 1, 1], [], []>} : vector<2x32xbf16>, vector<32x32xbf16>, vector<2x32xf32> -> vector<2x32xf32>
    %c0_12 = arith.constant 0 : index
    %c0_13 = arith.constant 0 : index
    %25 = vector.load %arg5[%c0_12, %c0_13] : memref<1x32xf32, #tpu.memory_space<vmem>>, vector<1x32xf32>
    %26 = vector.broadcast %25 : vector<1x32xf32> to vector<2x32xf32>
    %27 = arith.addf %24, %26 : vector<2x32xf32>
    %28 = math.tanh %27 : vector<2x32xf32>
    %c0_14 = arith.constant 0 : index
    %c0_15 = arith.constant 0 : index
    %29 = vector.load %arg6[%c0_14, %c0_15] : memref<8x2xf32, #tpu.memory_space<vmem>>, vector<8x2xf32>
    %cst_16 = arith.constant dense<0.000000e+00> : vector<8x32xf32>
    %30 = tpu.matmul %29, %28, %cst_16 {dimension_numbers = #tpu.dot_dimension_numbers<[1], [0], [0], [1], [0, 0, 1, 1], [], []>} : vector<8x2xf32>, vector<2x32xf32>, vector<8x32xf32> -> vector<8x32xf32>
    %c159_i32 = arith.constant 159 : i32
    %31 = tpu.dynamic_rotate %14 by %c159_i32 dim 0 : vector<160x32xf32>, i32 -> vector<160x32xf32>
    %32 = arith.maximumf %14, %31 : vector<160x32xf32>
    %c158_i32 = arith.constant 158 : i32
    %33 = tpu.dynamic_rotate %14 by %c158_i32 dim 0 : vector<160x32xf32>, i32 -> vector<160x32xf32>
    %34 = arith.maximumf %32, %33 : vector<160x32xf32>
    %c0_17 = arith.constant 0 : index
    %c0_18 = arith.constant 0 : index
    %35 = vector.load %arg7[%c0_17, %c0_18] : memref<32x32xbf16, #tpu.memory_space<vmem>>, vector<32x32xbf16>
    %36 = arith.truncf %34 : vector<160x32xf32> to vector<160x32xbf16>
    %cst_19 = arith.constant dense<0.000000e+00> : vector<160x32xf32>
    %37 = tpu.matmul %36, %35, %cst_19 {dimension_numbers = #tpu.dot_dimension_numbers<[1], [0], [0], [1], [0, 0, 1, 1], [], []>} : vector<160x32xbf16>, vector<32x32xbf16>, vector<160x32xf32> -> vector<160x32xf32>
    %c0_20 = arith.constant 0 : index
    %c0_21 = arith.constant 0 : index
    %38 = vector.load %arg8[%c0_20, %c0_21] : memref<1x32xf32, #tpu.memory_space<vmem>>, vector<1x32xf32>
    %39 = vector.broadcast %38 : vector<1x32xf32> to vector<160x32xf32>
    %40 = arith.addf %37, %39 : vector<160x32xf32>
    %41 = math.tanh %40 : vector<160x32xf32>
    %c0_22 = arith.constant 0 : index
    %c0_23 = arith.constant 0 : index
    %42 = vector.load %arg9[%c0_22, %c0_23] : memref<8x160xbf16, #tpu.memory_space<vmem>>, vector<8x160xbf16>
    %43 = arith.truncf %41 : vector<160x32xf32> to vector<160x32xbf16>
    %cst_24 = arith.constant dense<0.000000e+00> : vector<8x32xf32>
    %44 = tpu.matmul %42, %43, %cst_24 {dimension_numbers = #tpu.dot_dimension_numbers<[1], [0], [0], [1], [0, 0, 1, 1], [], []>} : vector<8x160xbf16>, vector<160x32xbf16>, vector<8x32xf32> -> vector<8x32xf32>
    %45 = arith.mulf %44, %30 : vector<8x32xf32>
    %c0_25 = arith.constant 0 : index
    %46 = memref.load %arg10[%c0_25] : memref<1xf32, #tpu.memory_space<smem>>
    %47 = vector.broadcast %46 : f32 to vector<8x32xf32>
    %48 = arith.addf %45, %47 : vector<8x32xf32>
    %49 = math.tanh %48 : vector<8x32xf32>
    %c0_26 = arith.constant 0 : index
    %c0_27 = arith.constant 0 : index
    %50 = vector.load %arg11[%c0_26, %c0_27] : memref<32x32xbf16, #tpu.memory_space<vmem>>, vector<32x32xbf16>
    %51 = arith.truncf %49 : vector<8x32xf32> to vector<8x32xbf16>
    %cst_28 = arith.constant dense<0.000000e+00> : vector<8x32xf32>
    %52 = tpu.matmul %51, %50, %cst_28 {dimension_numbers = #tpu.dot_dimension_numbers<[1], [0], [0], [1], [0, 0, 1, 1], [], []>} : vector<8x32xbf16>, vector<32x32xbf16>, vector<8x32xf32> -> vector<8x32xf32>
    %c0_29 = arith.constant 0 : index
    %c0_30 = arith.constant 0 : index
    %53 = vector.load %arg12[%c0_29, %c0_30] : memref<1x32xf32, #tpu.memory_space<vmem>>, vector<1x32xf32>
    %54 = vector.broadcast %53 : vector<1x32xf32> to vector<8x32xf32>
    %55 = arith.addf %52, %54 : vector<8x32xf32>
    %56 = math.tanh %55 : vector<8x32xf32>
    %c0_31 = arith.constant 0 : index
    %c0_32 = arith.constant 0 : index
    %57 = vector.load %arg13[%c0_31, %c0_32] : memref<32x1xbf16, #tpu.memory_space<vmem>>, vector<32x1xbf16>
    %58 = arith.truncf %56 : vector<8x32xf32> to vector<8x32xbf16>
    %cst_33 = arith.constant dense<0.000000e+00> : vector<8x1xf32>
    %59 = tpu.matmul %58, %57, %cst_33 {dimension_numbers = #tpu.dot_dimension_numbers<[1], [0], [0], [1], [0, 0, 1, 1], [], []>} : vector<8x32xbf16>, vector<32x1xbf16>, vector<8x1xf32> -> vector<8x1xf32>
    %c0_34 = arith.constant 0 : index
    %60 = memref.load %arg14[%c0_34] : memref<1xf32, #tpu.memory_space<smem>>
    %61 = vector.broadcast %60 : f32 to vector<8x1xf32>
    %62 = arith.addf %59, %61 : vector<8x1xf32>
    %63 = math.tanh %62 : vector<8x1xf32>
    %c0_35 = arith.constant 0 : index
    %c0_36 = arith.constant 0 : index
    %64 = vector.load %arg15[%c0_35, %c0_36] : memref<8x1xf32, #tpu.memory_space<vmem>>, vector<8x1xf32>
    tpu.vector_store %arg15[%c0_35, %c0_36], %63 {strides = array<i32>} : memref<8x1xf32, #tpu.memory_space<vmem>>, vector<8x1xf32>,
    return
  }
}

</mosaic_0001>

<llo_original>
// kernel: distributed_model_forward.1
$region0: #{distributed_model_forward.1}
  #allocation0 [shape = 'u32[]', space=smem, size = 0x4, offset = 0x4, fixed_abs, tag = 'smem constant byte address 0x4 - core index']
  #allocation1 [shape = 'u32[144,128]{1,0:T(1,128)}', space=vmem, size = 0x12000, scoped, tag = 'internal scratch']
  #allocation2 [shape = 'f32[1]{0:T(128)S(6)}', space=smem, size = 0x200, scoped, tag = 'scoped memory for distributed_model_forward.1']
  #allocation3 [shape = 'f32[1]{0:T(128)S(6)}', space=smem, size = 0x200, scoped, tag = 'scoped memory for distributed_model_forward.1']
  %s0 = inlined_call_operand.vmem [shape: f32[16,16], index: 0, kind: input, shape index: {}]
  %s1 = inlined_call_operand.vmem [shape: f32[160,16], index: 1, kind: input, shape index: {}]
  %s2 = inlined_call_operand.vmem [shape: bf16[48,32], index: 2, kind: input, shape index: {}]
  %s3 = inlined_call_operand.vmem [shape: f32[1,32], index: 3, kind: input, shape index: {}]
  %s4 = inlined_call_operand.vmem [shape: bf16[32,32], index: 4, kind: input, shape index: {}]
  %s5 = inlined_call_operand.vmem [shape: f32[1,32], index: 5, kind: input, shape index: {}]
  %s6 = inlined_call_operand.vmem [shape: f32[8,2], index: 6, kind: input, shape index: {}]
  %s7 = inlined_call_operand.vmem [shape: bf16[32,32], index: 7, kind: input, shape index: {}]
  %s8 = inlined_call_operand.vmem [shape: f32[1,32], index: 8, kind: input, shape index: {}]
  %s9 = inlined_call_operand.vmem [shape: bf16[8,160], index: 9, kind: input, shape index: {}]
  %s10 = inlined_call_operand.<no memory space> [shape: f32[1], index: 10, kind: input, shape index: {}]
  %s11 = inlined_call_operand.vmem [shape: bf16[32,32], index: 11, kind: input, shape index: {}]
  %s12 = inlined_call_operand.vmem [shape: f32[1,32], index: 12, kind: input, shape index: {}]
  %s13 = inlined_call_operand.vmem [shape: bf16[32,1], index: 13, kind: input, shape index: {}]
  %s14 = inlined_call_operand.<no memory space> [shape: f32[1], index: 14, kind: input, shape index: {}]
  %s15 = inlined_call_operand.vmem [shape: f32[8,1], index: 15, kind: output, shape index: {}]
  %s16 = sld [smem:[#allocation0]]
  $region70: #{distributed_model_forward.1} parent=0
    _
  %s18 = ssub.s32 1, %s16
  %s19 = scalar_select 0, %s18, %s16
  %20 = sst [smem:[#allocation2]] %s10
  %21 = sst [smem:[#allocation3]] %s14
  // Predicated region
  $region2: #{distributed_model_forward.1} parent=0 // pred_check
    _
  $region3: #{distributed_model_forward.1} parent=0 // pred_check_branch
    %23 = sbr.rel (0) target = $region5
  $region4: #{distributed_model_forward.1} parent=0 // pred_region
    _
  $region5: #{distributed_model_forward.1} parent=0 // pred_fallthru
    _
  // Predicated region
  $region6: #{distributed_model_forward.1} parent=0 // pred_check
    _
  $region7: #{distributed_model_forward.1} parent=0 // pred_check_branch
    %25 = sbr.rel (0) target = $region9
  $region8: #{distributed_model_forward.1} parent=0 // pred_region
    _
  $region9: #{distributed_model_forward.1} parent=0 // pred_fallthru
    _
  // Predicated region
  $region10: #{distributed_model_forward.1} parent=0 // pred_check
    _
  $region11: #{distributed_model_forward.1} parent=0 // pred_check_branch
    %27 = sbr.rel (0) target = $region13
  $region12: #{distributed_model_forward.1} parent=0 // pred_region
    _
  $region13: #{distributed_model_forward.1} parent=0 // pred_fallthru
    _
  // Predicated region
  $region14: #{distributed_model_forward.1} parent=0 // pred_check
    _
  $region15: #{distributed_model_forward.1} parent=0 // pred_check_branch
    %29 = sbr.rel (0) target = $region17
  $region16: #{distributed_model_forward.1} parent=0 // pred_region
    _
  $region17: #{distributed_model_forward.1} parent=0 // pred_fallthru
    _
  // Predicated region
  $region18: #{distributed_model_forward.1} parent=0 // pred_check
    _
  $region19: #{distributed_model_forward.1} parent=0 // pred_check_branch
    %31 = sbr.rel (0) target = $region21
  $region20: #{distributed_model_forward.1} parent=0 // pred_region
    _
  $region21: #{distributed_model_forward.1} parent=0 // pred_fallthru
    _
  // Predicated region
  $region22: #{distributed_model_forward.1} parent=0 // pred_check
    _
  $region23: #{distributed_model_forward.1} parent=0 // pred_check_branch
    %33 = sbr.rel (0) target = $region25
  $region24: #{distributed_model_forward.1} parent=0 // pred_region
    _
  $region25: #{distributed_model_forward.1} parent=0 // pred_fallthru
    _
  // Predicated region
  $region26: #{distributed_model_forward.1} parent=0 // pred_check
    _
  $region27: #{distributed_model_forward.1} parent=0 // pred_check_branch
    %35 = sbr.rel (0) target = $region29
  $region28: #{distributed_model_forward.1} parent=0 // pred_region
    _
  $region29: #{distributed_model_forward.1} parent=0 // pred_fallthru
    _
  // Predicated region
  $region30: #{distributed_model_forward.1} parent=0 // pred_check
    _
  $region31: #{distributed_model_forward.1} parent=0 // pred_check_branch
    %37 = sbr.rel (0) target = $region33
  $region32: #{distributed_model_forward.1} parent=0 // pred_region
    _
  $region33: #{distributed_model_forward.1} parent=0 // pred_fallthru
    _
  // Predicated region
  $region34: #{distributed_model_forward.1} parent=0 // pred_check
    _
  $region35: #{distributed_model_forward.1} parent=0 // pred_check_branch
    %39 = sbr.rel (0) target = $region37
  $region36: #{distributed_model_forward.1} parent=0 // pred_region
    _
  $region37: #{distributed_model_forward.1} parent=0 // pred_fallthru
    _
  // Predicated region
  $region38: #{distributed_model_forward.1} parent=0 // pred_check
    _
  $region39: #{distributed_model_forward.1} parent=0 // pred_check_branch
    %41 = sbr.rel (0) target = $region41
  $region40: #{distributed_model_forward.1} parent=0 // pred_region
    _
  $region41: #{distributed_model_forward.1} parent=0 // pred_fallthru
    _
  // Predicated region
  $region42: #{distributed_model_forward.1} parent=0 // pred_check
    _
  $region43: #{distributed_model_forward.1} parent=0 // pred_check_branch
    %43 = sbr.rel (0) target = $region45
  $region44: #{distributed_model_forward.1} parent=0 // pred_region
    _
  $region45: #{distributed_model_forward.1} parent=0 // pred_fallthru
    _
  // Predicated region
  $region46: #{distributed_model_forward.1} parent=0 // pred_check
    _
  $region47: #{distributed_model_forward.1} parent=0 // pred_check_branch
    %45 = sbr.rel (0) target = $region49
  $region48: #{distributed_model_forward.1} parent=0 // pred_region
    _
  $region49: #{distributed_model_forward.1} parent=0 // pred_fallthru
    _
  // Predicated region
  $region50: #{distributed_model_forward.1} parent=0 // pred_check
    _
  $region51: #{distributed_model_forward.1} parent=0 // pred_check_branch
    %47 = sbr.rel (0) target = $region53
  $region52: #{distributed_model_forward.1} parent=0 // pred_region
    _
  $region53: #{distributed_model_forward.1} parent=0 // pred_fallthru
    _
  // Predicated region
  $region54: #{distributed_model_forward.1} parent=0 // pred_check
    _
  $region55: #{distributed_model_forward.1} parent=0 // pred_check_branch
    %49 = sbr.rel (0) target = $region57
  $region56: #{distributed_model_forward.1} parent=0 // pred_region
    _
  $region57: #{distributed_model_forward.1} parent=0 // pred_fallthru
    _
  // Predicated region
  $region58: #{distributed_model_forward.1} parent=0 // pred_check
    _
  $region59: #{distributed_model_forward.1} parent=0 // pred_check_branch
    %51 = sbr.rel (0) target = $region61
  $region60: #{distributed_model_forward.1} parent=0 // pred_region
    _
  $region61: #{distributed_model_forward.1} parent=0 // pred_fallthru
    _
  %v53 = vld [vmem:[%s0] sm:$0xff]
  %v54 = vld [vmem:[%s0 + $0x8] sm:$0xff]
  %v55 = vld [vmem:[%s1] sm:$0xff]
  %v56 = vld [vmem:[%s1 + $0x8] sm:$0xff]
  %v57 = vld [vmem:[%s1 + $0x10] sm:$0xff]
  %v58 = vld [vmem:[%s1 + $0x18] sm:$0xff]
  %v59 = vld [vmem:[%s1 + $0x20] sm:$0xff]
  %v60 = vld [vmem:[%s1 + $0x28] sm:$0xff]
  %v61 = vld [vmem:[%s1 + $0x30] sm:$0xff]
  %v62 = vld [vmem:[%s1 + $0x38] sm:$0xff]
  %v63 = vld [vmem:[%s1 + $0x40] sm:$0xff]
  %v64 = vld [vmem:[%s1 + $0x48] sm:$0xff]
  %v65 = vld [vmem:[%s1 + $0x50] sm:$0xff]
  %v66 = vld [vmem:[%s1 + $0x58] sm:$0xff]
  %v67 = vld [vmem:[%s1 + $0x60] sm:$0xff]
  %v68 = vld [vmem:[%s1 + $0x68] sm:$0xff]
  %v69 = vld [vmem:[%s1 + $0x70] sm:$0xff]
  %v70 = vld [vmem:[%s1 + $0x78] sm:$0xff]
  %v71 = vld [vmem:[%s1 + $0x80] sm:$0xff]
  %v72 = vld [vmem:[%s1 + $0x88] sm:$0xff]
  %v73 = vld [vmem:[%s1 + $0x90] sm:$0xff]
  %v74 = vld [vmem:[%s1 + $0x98] sm:$0xff]
  %v75 = vrot.slane %v53, 1
  %v76 = vrot.slane %v54, 1
  %v77 = vrot.slane %v55, 1
  %v78 = vrot.slane %v56, 1
  %v79 = vrot.slane %v57, 1
  %v80 = vrot.slane %v58, 1
  %v81 = vrot.slane %v59, 1
  %v82 = vrot.slane %v60, 1
  %v83 = vrot.slane %v61, 1
  %v84 = vrot.slane %v62, 1
  %v85 = vrot.slane %v63, 1
  %v86 = vrot.slane %v64, 1
  %v87 = vrot.slane %v65, 1
  %v88 = vrot.slane %v66, 1
  %v89 = vrot.slane %v67, 1
  %v90 = vrot.slane %v68, 1
  %v91 = vrot.slane %v69, 1
  %v92 = vrot.slane %v70, 1
  %v93 = vrot.slane %v71, 1
  %v94 = vrot.slane %v72, 1
  %v95 = vrot.slane %v73, 1
  %v96 = vrot.slane %v74, 1
  %v97 = vlaneseq
  %v98 = vshrl.u32 %v97, 7
  %vm99 = vcmp.lt.s32.totalorder %v98, 7
  %v100 = vsel %vm99, %v95, %v96
  %v101 = vsel %vm99, %v94, %v95
  %v102 = vsel %vm99, %v93, %v94
  %v103 = vsel %vm99, %v92, %v93
  %v104 = vsel %vm99, %v91, %v92
  %v105 = vsel %vm99, %v90, %v91
  %v106 = vsel %vm99, %v89, %v90
  %v107 = vsel %vm99, %v88, %v89
  %v108 = vsel %vm99, %v87, %v88
  %v109 = vsel %vm99, %v86, %v87
  %v110 = vsel %vm99, %v85, %v86
  %v111 = vsel %vm99, %v84, %v85
  %v112 = vsel %vm99, %v83, %v84
  %v113 = vsel %vm99, %v82, %v83
  %v114 = vsel %vm99, %v81, %v82
  %v115 = vsel %vm99, %v80, %v81
  %v116 = vsel %vm99, %v79, %v80
  %v117 = vsel %vm99, %v78, %v79
  %v118 = vsel %vm99, %v77, %v78
  %v119 = vsel %vm99, %v76, %v77
  %v120 = vsel %vm99, %v75, %v76
  %v121 = vsel %vm99, %v96, %v75
  %v122 = vrot.slane %v53, 2
  %v123 = vrot.slane %v54, 2
  %v124 = vrot.slane %v55, 2
  %v125 = vrot.slane %v56, 2
  %v126 = vrot.slane %v57, 2
  %v127 = vrot.slane %v58, 2
  %v128 = vrot.slane %v59, 2
  %v129 = vrot.slane %v60, 2
  %v130 = vrot.slane %v61, 2
  %v131 = vrot.slane %v62, 2
  %v132 = vrot.slane %v63, 2
  %v133 = vrot.slane %v64, 2
  %v134 = vrot.slane %v65, 2
  %v135 = vrot.slane %v66, 2
  %v136 = vrot.slane %v67, 2
  %v137 = vrot.slane %v68, 2
  %v138 = vrot.slane %v69, 2
  %v139 = vrot.slane %v70, 2
  %v140 = vrot.slane %v71, 2
  %v141 = vrot.slane %v72, 2
  %v142 = vrot.slane %v73, 2
  %v143 = vrot.slane %v74, 2
  %vm144 = vcmp.lt.s32.totalorder %v98, 6
  %v145 = vsel %vm144, %v142, %v143
  %v146 = vsel %vm144, %v141, %v142
  %v147 = vsel %vm144, %v140, %v141
  %v148 = vsel %vm144, %v139, %v140
  %v149 = vsel %vm144, %v138, %v139
  %v150 = vsel %vm144, %v137, %v138
  %v151 = vsel %vm144, %v136, %v137
  %v152 = vsel %vm144, %v135, %v136
  %v153 = vsel %vm144, %v134, %v135
  %v154 = vsel %vm144, %v133, %v134
  %v155 = vsel %vm144, %v132, %v133
  %v156 = vsel %vm144, %v131, %v132
  %v157 = vsel %vm144, %v130, %v131
  %v158 = vsel %vm144, %v129, %v130
  %v159 = vsel %vm144, %v128, %v129
  %v160 = vsel %vm144, %v127, %v128
  %v161 = vsel %vm144, %v126, %v127
  %v162 = vsel %vm144, %v125, %v126
  %v163 = vsel %vm144, %v124, %v125
  %v164 = vsel %vm144, %v123, %v124
  %v165 = vsel %vm144, %v122, %v123
  %v166 = vsel %vm144, %v143, %v122
  %189 = vrot.lane.b32.xlu0 %v120, 16
  %v190 = vpop.permute.xlu0 %189
  %191 = vrot.lane.b32.xlu0 %v119, 16
  %v192 = vpop.permute.xlu0 %191
  %193 = vrot.lane.b32.xlu0 %v118, 16
  %v194 = vpop.permute.xlu0 %193
  %195 = vrot.lane.b32.xlu0 %v117, 16
  %v196 = vpop.permute.xlu0 %195
  %197 = vrot.lane.b32.xlu0 %v116, 16
  %v198 = vpop.permute.xlu0 %197
  %199 = vrot.lane.b32.xlu0 %v115, 16
  %v200 = vpop.permute.xlu0 %199
  %201 = vrot.lane.b32.xlu0 %v114, 16
  %v202 = vpop.permute.xlu0 %201
  %203 = vrot.lane.b32.xlu0 %v113, 16
  %v204 = vpop.permute.xlu0 %203
  %205 = vrot.lane.b32.xlu0 %v112, 16
  %v206 = vpop.permute.xlu0 %205
  %207 = vrot.lane.b32.xlu0 %v111, 16
  %v208 = vpop.permute.xlu0 %207
  %209 = vrot.lane.b32.xlu0 %v110, 16
  %v210 = vpop.permute.xlu0 %209
  %211 = vrot.lane.b32.xlu0 %v109, 16
  %v212 = vpop.permute.xlu0 %211
  %213 = vrot.lane.b32.xlu0 %v108, 16
  %v214 = vpop.permute.xlu0 %213
  %215 = vrot.lane.b32.xlu0 %v107, 16
  %v216 = vpop.permute.xlu0 %215
  %217 = vrot.lane.b32.xlu0 %v106, 16
  %v218 = vpop.permute.xlu0 %217
  %219 = vrot.lane.b32.xlu0 %v105, 16
  %v220 = vpop.permute.xlu0 %219
  %221 = vrot.lane.b32.xlu0 %v104, 16
  %v222 = vpop.permute.xlu0 %221
  %223 = vrot.lane.b32.xlu0 %v103, 16
  %v224 = vpop.permute.xlu0 %223
  %225 = vrot.lane.b32.xlu0 %v102, 16
  %v226 = vpop.permute.xlu0 %225
  %227 = vrot.lane.b32.xlu0 %v101, 16
  %v228 = vpop.permute.xlu0 %227
  %229 = vrot.lane.b32.xlu0 %v100, 16
  %v230 = vpop.permute.xlu0 %229
  %231 = vrot.lane.b32.xlu0 %v121, 16
  %v232 = vpop.permute.xlu0 %231
  %277 = vrot.lane.b32.xlu0 %v165, 32
  %v278 = vpop.permute.xlu0 %277
  %279 = vrot.lane.b32.xlu0 %v164, 32
  %v280 = vpop.permute.xlu0 %279
  %281 = vrot.lane.b32.xlu0 %v163, 32
  %v282 = vpop.permute.xlu0 %281
  %283 = vrot.lane.b32.xlu0 %v162, 32
  %v284 = vpop.permute.xlu0 %283
  %285 = vrot.lane.b32.xlu0 %v161, 32
  %v286 = vpop.permute.xlu0 %285
  %287 = vrot.lane.b32.xlu0 %v160, 32
  %v288 = vpop.permute.xlu0 %287
  %289 = vrot.lane.b32.xlu0 %v159, 32
  %v290 = vpop.permute.xlu0 %289
  %291 = vrot.lane.b32.xlu0 %v158, 32
  %v292 = vpop.permute.xlu0 %291
  %293 = vrot.lane.b32.xlu0 %v157, 32
  %v294 = vpop.permute.xlu0 %293
  %295 = vrot.lane.b32.xlu0 %v156, 32
  %v296 = vpop.permute.xlu0 %295
  %297 = vrot.lane.b32.xlu0 %v155, 32
  %v298 = vpop.permute.xlu0 %297
  %299 = vrot.lane.b32.xlu0 %v154, 32
  %v300 = vpop.permute.xlu0 %299
  %301 = vrot.lane.b32.xlu0 %v153, 32
  %v302 = vpop.permute.xlu0 %301
  %303 = vrot.lane.b32.xlu0 %v152, 32
  %v304 = vpop.permute.xlu0 %303
  %305 = vrot.lane.b32.xlu0 %v151, 32
  %v306 = vpop.permute.xlu0 %305
  %307 = vrot.lane.b32.xlu0 %v150, 32
  %v308 = vpop.permute.xlu0 %307
  %309 = vrot.lane.b32.xlu0 %v149, 32
  %v310 = vpop.permute.xlu0 %309
  %311 = vrot.lane.b32.xlu0 %v148, 32
  %v312 = vpop.permute.xlu0 %311
  %313 = vrot.lane.b32.xlu0 %v147, 32
  %v314 = vpop.permute.xlu0 %313
  %315 = vrot.lane.b32.xlu0 %v146, 32
  %v316 = vpop.permute.xlu0 %315
  %317 = vrot.lane.b32.xlu0 %v145, 32
  %v318 = vpop.permute.xlu0 %317
  %319 = vrot.lane.b32.xlu0 %v166, 32
  %v320 = vpop.permute.xlu0 %319
  %vm343 = vcmask 130048
  %v344 = vsel %vm343, %v53, %v190
  %v345 = vsel %vm343, %v54, %v192
  %v346 = vsel %vm343, %v55, %v194
  %v347 = vsel %vm343, %v56, %v196
  %v348 = vsel %vm343, %v57, %v198
  %v349 = vsel %vm343, %v58, %v200
  %v350 = vsel %vm343, %v59, %v202
  %v351 = vsel %vm343, %v60, %v204
  %v352 = vsel %vm343, %v61, %v206
  %v353 = vsel %vm343, %v62, %v208
  %v354 = vsel %vm343, %v63, %v210
  %v355 = vsel %vm343, %v64, %v212
  %v356 = vsel %vm343, %v65, %v214
  %v357 = vsel %vm343, %v66, %v216
  %v358 = vsel %vm343, %v67, %v218
  %v359 = vsel %vm343, %v68, %v220
  %v360 = vsel %vm343, %v69, %v222
  %v361 = vsel %vm343, %v70, %v224
  %v362 = vsel %vm343, %v71, %v226
  %v363 = vsel %vm343, %v72, %v228
  %v364 = vsel %vm343, %v73, %v230
  %v365 = vsel %vm343, %v74, %v232
  %vm366 = vcmask 261120
  %v367 = vsel %vm366, %v344, %v278
  %v368 = vsel %vm366, %v345, %v280
  %v369 = vsel %vm366, %v346, %v282
  %v370 = vsel %vm366, %v347, %v284
  %v371 = vsel %vm366, %v348, %v286
  %v372 = vsel %vm366, %v349, %v288
  %v373 = vsel %vm366, %v350, %v290
  %v374 = vsel %vm366, %v351, %v292
  %v375 = vsel %vm366, %v352, %v294
  %v376 = vsel %vm366, %v353, %v296
  %v377 = vsel %vm366, %v354, %v298
  %v378 = vsel %vm366, %v355, %v300
  %v379 = vsel %vm366, %v356, %v302
  %v380 = vsel %vm366, %v357, %v304
  %v381 = vsel %vm366, %v358, %v306
  %v382 = vsel %vm366, %v359, %v308
  %v383 = vsel %vm366, %v360, %v310
  %v384 = vsel %vm366, %v361, %v312
  %v385 = vsel %vm366, %v362, %v314
  %v386 = vsel %vm366, %v363, %v316
  %v387 = vsel %vm366, %v364, %v318
  %v388 = vsel %vm366, %v365, %v320
  %v389 = vld [vmem:[%s2] sm:$0xf]
  %v390 = vld [vmem:[%s2 + $0x4] sm:$0xf]
  %v391 = vld [vmem:[%s2 + $0x8] sm:$0xf]
  %v392 = vld [vmem:[%s2 + $0xc] sm:$0xf]
  %v393 = vld [vmem:[%s2 + $0x10] sm:$0xf]
  %v394 = vld [vmem:[%s2 + $0x14] sm:$0xf]
  %v395 = vpack.c.bf16 %v368, %v367
  %v396 = vpack.c.bf16 %v370, %v369
  %v397 = vpack.c.bf16 %v372, %v371
  %v398 = vpack.c.bf16 %v374, %v373
  %v399 = vpack.c.bf16 %v376, %v375
  %v400 = vpack.c.bf16 %v378, %v377
  %v401 = vpack.c.bf16 %v380, %v379
  %v402 = vpack.c.bf16 %v382, %v381
  %v403 = vpack.c.bf16 %v384, %v383
  %v404 = vpack.c.bf16 %v386, %v385
  %v405 = vpack.c.bf16 %v388, %v387
  %v406 = vld [vmem:[%s3] sm:$0x1]
  %v408 = vlaneseq
  %v409 = vshrl.u32 %v408, 7
  %v410 = vsub.s32 0, %v409
  %v411 = vrot.slane %v406, %v410
  %v419 = vunpack.c.l.b16 %v389
  %v420 = vunpack.c.l.b16 %v390
  %v421 = vunpack.c.l.b16 %v391
  %v422 = vunpack.c.l.b16 %v392
  %v423 = vunpack.c.l.b16 %v393
  %v424 = vunpack.c.l.b16 %v394
  %v425 = vpack.c.b16 %v420, %v419
  %v426 = vpack.c.b16 %v422, %v421
  %v427 = vpack.c.b16 %v424, %v423
  %vm431 = vcmask 392192
  %v433 = vsel %vm431, %v395, 0
  %v436 = vsel %vm431, %v396, 0
  %v439 = vsel %vm431, %v397, 0
  %v442 = vsel %vm431, %v398, 0
  %v445 = vsel %vm431, %v399, 0
  %v448 = vsel %vm431, %v400, 0
  %v451 = vsel %vm431, %v401, 0
  %v454 = vsel %vm431, %v402, 0
  %v457 = vsel %vm431, %v403, 0
  %v460 = vsel %vm431, %v404, 0
  %v463 = vsel %vm431, %v405, 0
  %465 = vmatprep.subr.bf16.mxu0 0
  %466 = vmatpush1.bf16.msra.mxu0 %v425
  %467 = vmatprep.subr.bf16.mxu0 0
  %468 = vmatpush1.bf16.msra.mxu0 %v426
  %469 = vmatprep.subr.bf16.mxu0 0
  %470 = vmatpush1.bf16.msra.mxu0 %v427
  %471 = vmatprep.subr.bf16.mxu0 0
  %472 = vmatpush1.bf16.msra.mxu0 0
  %473 = vmatprep.subr.bf16.mxu0 0
  %474 = vmatpush1.bf16.msra.mxu0 0
  %475 = vmatprep.subr.bf16.mxu0 0
  %476 = vmatpush1.bf16.msra.mxu0 0
  %477 = vmatprep.subr.bf16.mxu0 0
  %478 = vmatpush1.bf16.msra.mxu0 0
  %479 = vmatprep.subr.bf16.mxu0 0
  %480 = vmatpush1.bf16.msra.mxu0 0
  %481 = vmatprep.subr.bf16.mxu0 0
  %482 = vmatpush1.bf16.msra.mxu0 0
  %483 = vmatprep.subr.bf16.mxu0 0
  %484 = vmatpush1.bf16.msra.mxu0 0
  %485 = vmatprep.subr.bf16.mxu0 0
  %486 = vmatpush1.bf16.msra.mxu0 0
  %487 = vmatprep.subr.bf16.mxu0 0
  %488 = vmatpush1.bf16.msra.mxu0 0
  %489 = vmatprep.subr.bf16.mxu0 0
  %490 = vmatpush1.bf16.msra.mxu0 0
  %491 = vmatprep.subr.bf16.mxu0 0
  %492 = vmatpush1.bf16.msra.mxu0 0
  %493 = vmatprep.subr.bf16.mxu0 0
  %494 = vmatpush1.bf16.msra.mxu0 0
  %495 = vmatprep.subr.bf16.mxu0 0
  %496 = vmatpush1.bf16.msra.mxu0 0
  %497 = vmatprep.mubr.bf16.mxu0 0
  %498 = vmatmul.mubr.bf16.gmra.mrb[0].mxu0 %v433
  %v499 = vpop.f32.mrb[0].mxu0
  %v500 = vadd.f32 %v411, %v499
  %v501 = vpop.f32.mrb[0].mxu0
  %v502 = vpop.f32.mrb[0].mxu0
  %v503 = vadd.f32 %v411, %v502
  %v504 = vpop.f32.mrb[0].mxu0
  %505 = vmatprep.mubr.bf16.mxu0 0
  %506 = vmatmul.mubr.bf16.gmra.mrb[0].mxu0 %v436
  %v507 = vpop.f32.mrb[0].mxu0
  %v508 = vadd.f32 %v411, %v507
  %v509 = vpop.f32.mrb[0].mxu0
  %v510 = vpop.f32.mrb[0].mxu0
  %v511 = vadd.f32 %v411, %v510
  %v512 = vpop.f32.mrb[0].mxu0
  %513 = vmatprep.mubr.bf16.mxu0 0
  %514 = vmatmul.mubr.bf16.gmra.mrb[0].mxu0 %v439
  %v515 = vpop.f32.mrb[0].mxu0
  %v516 = vadd.f32 %v411, %v515
  %v517 = vpop.f32.mrb[0].mxu0
  %v518 = vpop.f32.mrb[0].mxu0
  %v519 = vadd.f32 %v411, %v518
  %v520 = vpop.f32.mrb[0].mxu0
  %521 = vmatprep.mubr.bf16.mxu0 0
  %522 = vmatmul.mubr.bf16.gmra.mrb[0].mxu0 %v442
  %v523 = vpop.f32.mrb[0].mxu0
  %v524 = vadd.f32 %v411, %v523
  %v525 = vpop.f32.mrb[0].mxu0
  %v526 = vpop.f32.mrb[0].mxu0
  %v527 = vadd.f32 %v411, %v526
  %v528 = vpop.f32.mrb[0].mxu0
  %529 = vmatprep.mubr.bf16.mxu0 0
  %530 = vmatmul.mubr.bf16.gmra.mrb[0].mxu0 %v445
  %v531 = vpop.f32.mrb[0].mxu0
  %v532 = vadd.f32 %v411, %v531
  %v533 = vpop.f32.mrb[0].mxu0
  %v534 = vpop.f32.mrb[0].mxu0
  %v535 = vadd.f32 %v411, %v534
  %v536 = vpop.f32.mrb[0].mxu0
  %537 = vmatprep.mubr.bf16.mxu0 0
  %538 = vmatmul.mubr.bf16.gmra.mrb[0].mxu0 %v448
  %v539 = vpop.f32.mrb[0].mxu0
  %v540 = vadd.f32 %v411, %v539
  %v541 = vpop.f32.mrb[0].mxu0
  %v542 = vpop.f32.mrb[0].mxu0
  %v543 = vadd.f32 %v411, %v542
  %v544 = vpop.f32.mrb[0].mxu0
  %545 = vmatprep.mubr.bf16.mxu0 0
  %546 = vmatmul.mubr.bf16.gmra.mrb[0].mxu0 %v451
  %v547 = vpop.f32.mrb[0].mxu0
  %v548 = vadd.f32 %v411, %v547
  %v549 = vpop.f32.mrb[0].mxu0
  %v550 = vpop.f32.mrb[0].mxu0
  %v551 = vadd.f32 %v411, %v550
  %v552 = vpop.f32.mrb[0].mxu0
  %553 = vmatprep.mubr.bf16.mxu0 0
  %554 = vmatmul.mubr.bf16.gmra.mrb[0].mxu0 %v454
  %v555 = vpop.f32.mrb[0].mxu0
  %v556 = vadd.f32 %v411, %v555
  %v557 = vpop.f32.mrb[0].mxu0
  %v558 = vpop.f32.mrb[0].mxu0
  %v559 = vadd.f32 %v411, %v558
  %v560 = vpop.f32.mrb[0].mxu0
  %561 = vmatprep.mubr.bf16.mxu0 0
  %562 = vmatmul.mubr.bf16.gmra.mrb[0].mxu0 %v457
  %v563 = vpop.f32.mrb[0].mxu0
  %v564 = vadd.f32 %v411, %v563
  %v565 = vpop.f32.mrb[0].mxu0
  %v566 = vpop.f32.mrb[0].mxu0
  %v567 = vadd.f32 %v411, %v566
  %v568 = vpop.f32.mrb[0].mxu0
  %569 = vmatprep.mubr.bf16.mxu0 0
  %570 = vmatmul.mubr.bf16.gmra.mrb[0].mxu0 %v460
  %v571 = vpop.f32.mrb[0].mxu0
  %v572 = vadd.f32 %v411, %v571
  %v573 = vpop.f32.mrb[0].mxu0
  %v574 = vpop.f32.mrb[0].mxu0
  %v575 = vadd.f32 %v411, %v574
  %v576 = vpop.f32.mrb[0].mxu0
  %577 = vmatprep.mubr.bf16.mxu0 0
  %578 = vmatmul.mubr.bf16.gmra.mrb[0].mxu0 %v463
  %v579 = vpop.f32.mrb[0].mxu0
  %v580 = vadd.f32 %v411, %v579
  %v581 = vpop.f32.mrb[0].mxu0
  %v582 = vpop.f32.mrb[0].mxu0
  %v583 = vadd.f32 %v411, %v582
  %v584 = vpop.f32.mrb[0].mxu0
  %585 = vdwg.mxu0
  %v586 = vtanh.pop %v500
  %v587 = vtanh.pop %v503
  %v588 = vtanh.pop %v508
  %v589 = vtanh.pop %v511
  %v590 = vtanh.pop %v516
  %v591 = vtanh.pop %v519
  %v592 = vtanh.pop %v524
  %v593 = vtanh.pop %v527
  %v594 = vtanh.pop %v532
  %v595 = vtanh.pop %v535
  %v596 = vtanh.pop %v540
  %v597 = vtanh.pop %v543
  %v598 = vtanh.pop %v548
  %v599 = vtanh.pop %v551
  %v600 = vtanh.pop %v556
  %v601 = vtanh.pop %v559
  %v602 = vtanh.pop %v564
  %v603 = vtanh.pop %v567
  %v604 = vtanh.pop %v572
  %v605 = vtanh.pop %v575
  %v606 = vtanh.pop %v580
  %v607 = vtanh.pop %v583
  %vm608 = vcmask 259072
  %v609 = vsel %vm608, %v586, -inf
  %v610 = vrot.slane %v609, 4
  %v611 = vmax.f32 %v609, %v610
  %v612 = vrot.slane %v611, 2
  %v613 = vmax.f32 %v611, %v612
  %v614 = vrot.slane %v613, 1
  %v615 = vmax.f32 %v613, %v614
  %v616 = vsel %vm608, %v587, -inf
  %v617 = vrot.slane %v616, 4
  %v618 = vmax.f32 %v616, %v617
  %v619 = vrot.slane %v618, 2
  %v620 = vmax.f32 %v618, %v619
  %v621 = vrot.slane %v620, 1
  %v622 = vmax.f32 %v620, %v621
  %vm623 = vcmask 1040384
  %v624 = vsel %vm623, %v615, %v622
  %v625 = vld [vmem:[%s4] sm:$0xf]
  %v626 = vld [vmem:[%s4 + $0x4] sm:$0xf]
  %v627 = vld [vmem:[%s4 + $0x8] sm:$0xf]
  %v628 = vld [vmem:[%s4 + $0xc] sm:$0xf]
  %v629 = vpack.c.bf16 %v624, %v624
  %v630 = vld [vmem:[%s5] sm:$0x1]
  %v632 = vlaneseq
  %v633 = vshrl.u32 %v632, 7
  %v634 = vsub.s32 0, %v633
  %v635 = vrot.slane %v630, %v634
  %v641 = vunpack.c.l.b16 %v625
  %v642 = vunpack.c.l.b16 %v626
  %v643 = vunpack.c.l.b16 %v627
  %v644 = vunpack.c.l.b16 %v628
  %v645 = vpack.c.b16 %v642, %v641
  %v646 = vpack.c.b16 %v644, %v643
  %v650 = vsel %vm366, %v629, 0
  %652 = vmatprep.subr.bf16.mxu0 0
  %653 = vmatpush1.bf16.msra.mxu0 %v645
  %654 = vmatprep.subr.bf16.mxu0 0
  %655 = vmatpush1.bf16.msra.mxu0 %v646
  %656 = vmatprep.subr.bf16.mxu0 0
  %657 = vmatpush1.bf16.msra.mxu0 0
  %658 = vmatprep.subr.bf16.mxu0 0
  %659 = vmatpush1.bf16.msra.mxu0 0
  %660 = vmatprep.subr.bf16.mxu0 0
  %661 = vmatpush1.bf16.msra.mxu0 0
  %662 = vmatprep.subr.bf16.mxu0 0
  %663 = vmatpush1.bf16.msra.mxu0 0
  %664 = vmatprep.subr.bf16.mxu0 0
  %665 = vmatpush1.bf16.msra.mxu0 0
  %666 = vmatprep.subr.bf16.mxu0 0
  %667 = vmatpush1.bf16.msra.mxu0 0
  %668 = vmatprep.subr.bf16.mxu0 0
  %669 = vmatpush1.bf16.msra.mxu0 0
  %670 = vmatprep.subr.bf16.mxu0 0
  %671 = vmatpush1.bf16.msra.mxu0 0
  %672 = vmatprep.subr.bf16.mxu0 0
  %673 = vmatpush1.bf16.msra.mxu0 0
  %674 = vmatprep.subr.bf16.mxu0 0
  %675 = vmatpush1.bf16.msra.mxu0 0
  %676 = vmatprep.subr.bf16.mxu0 0
  %677 = vmatpush1.bf16.msra.mxu0 0
  %678 = vmatprep.subr.bf16.mxu0 0
  %679 = vmatpush1.bf16.msra.mxu0 0
  %680 = vmatprep.subr.bf16.mxu0 0
  %681 = vmatpush1.bf16.msra.mxu0 0
  %682 = vmatprep.subr.bf16.mxu0 0
  %683 = vmatpush1.bf16.msra.mxu0 0
  %684 = vmatprep.mubr.bf16.mxu0 0
  %685 = vmatmul.mubr.bf16.gmra.mrb[0].mxu0 %v650
  %v686 = vpop.f32.mrb[0].mxu0
  %v687 = vadd.f32 %v635, %v686
  %v688 = vpop.f32.mrb[0].mxu0
  %v689 = vpop.f32.mrb[0].mxu0
  %v690 = vpop.f32.mrb[0].mxu0
  %691 = vdwg.mxu0
  %v692 = vtanh.pop %v687
  %v693 = vld [vmem:[%s6] sm:$0xff]
  %vm694 = vcmask 15360
  %v696 = vsel %vm694, %v693, 0
  %vm698 = vcmask 1041408
  %v700 = vsel %vm698, %v692, 0
  %702 = vmatprep.subr.mxu0 0.0
  %703 = vmatpush1.msra.mxu0 %v700
  %704 = vmatprep.subr.mxu0 0.0
  %705 = vmatpush1.msra.mxu0 0.0
  %706 = vmatprep.subr.mxu0 0.0
  %707 = vmatpush1.msra.mxu0 0.0
  %708 = vmatprep.subr.mxu0 0.0
  %709 = vmatpush1.msra.mxu0 0.0
  %710 = vmatprep.subr.mxu0 0.0
  %711 = vmatpush1.msra.mxu0 0.0
  %712 = vmatprep.subr.mxu0 0.0
  %713 = vmatpush1.msra.mxu0 0.0
  %714 = vmatprep.subr.mxu0 0.0
  %715 = vmatpush1.msra.mxu0 0.0
  %716 = vmatprep.subr.mxu0 0.0
  %717 = vmatpush1.msra.mxu0 0.0
  %718 = vmatprep.subr.mxu0 0.0
  %719 = vmatpush1.msra.mxu0 0.0
  %720 = vmatprep.subr.mxu0 0.0
  %721 = vmatpush1.msra.mxu0 0.0
  %722 = vmatprep.subr.mxu0 0.0
  %723 = vmatpush1.msra.mxu0 0.0
  %724 = vmatprep.subr.mxu0 0.0
  %725 = vmatpush1.msra.mxu0 0.0
  %726 = vmatprep.subr.mxu0 0.0
  %727 = vmatpush1.msra.mxu0 0.0
  %728 = vmatprep.subr.mxu0 0.0
  %729 = vmatpush1.msra.mxu0 0.0
  %730 = vmatprep.subr.mxu0 0.0
  %731 = vmatpush1.msra.mxu0 0.0
  %732 = vmatprep.subr.mxu0 0.0
  %733 = vmatpush1.msra.mxu0 0.0
  %734 = vmatprep.subr.mxu0 0.0
  %735 = vmatpush1.msra.mxu0 0.0
  %736 = vmatprep.subr.mxu0 0.0
  %737 = vmatpush1.msra.mxu0 0.0
  %738 = vmatprep.subr.mxu0 0.0
  %739 = vmatpush1.msra.mxu0 0.0
  %740 = vmatprep.subr.mxu0 0.0
  %741 = vmatpush1.msra.mxu0 0.0
  %742 = vmatprep.subr.mxu0 0.0
  %743 = vmatpush1.msra.mxu0 0.0
  %744 = vmatprep.subr.mxu0 0.0
  %745 = vmatpush1.msra.mxu0 0.0
  %746 = vmatprep.subr.mxu0 0.0
  %747 = vmatpush1.msra.mxu0 0.0
  %748 = vmatprep.subr.mxu0 0.0
  %749 = vmatpush1.msra.mxu0 0.0
  %750 = vmatprep.subr.mxu0 0.0
  %751 = vmatpush1.msra.mxu0 0.0
  %752 = vmatprep.subr.mxu0 0.0
  %753 = vmatpush1.msra.mxu0 0.0
  %754 = vmatprep.subr.mxu0 0.0
  %755 = vmatpush1.msra.mxu0 0.0
  %756 = vmatprep.subr.mxu0 0.0
  %757 = vmatpush1.msra.mxu0 0.0
  %758 = vmatprep.subr.mxu0 0.0
  %759 = vmatpush1.msra.mxu0 0.0
  %760 = vmatprep.subr.mxu0 0.0
  %761 = vmatpush1.msra.mxu0 0.0
  %762 = vmatprep.subr.mxu0 0.0
  %763 = vmatpush1.msra.mxu0 0.0
  %764 = vmatprep.subr.mxu0 0.0
  %765 = vmatpush1.msra.mxu0 0.0
  %766 = vmatprep.mubr.f32.mxu0 0.0
  %767 = vmatmul.mubr.f32.gmra.mrb[0].mxu0 %v696
  %v768 = vpop.f32.mrb[0].mxu0
  %v769 = vadd.f32 0.0, %v768
  %v770 = vpop.f32.mrb[0].mxu0
  %771 = vdwg.mxu0
  %v772 = vrot.slane %v588, 1
  %v773 = vrot.slane %v589, 1
  %v774 = vrot.slane %v590, 1
  %v775 = vrot.slane %v591, 1
  %v776 = vrot.slane %v592, 1
  %v777 = vrot.slane %v593, 1
  %v778 = vrot.slane %v594, 1
  %v779 = vrot.slane %v595, 1
  %v780 = vrot.slane %v596, 1
  %v781 = vrot.slane %v597, 1
  %v782 = vrot.slane %v598, 1
  %v783 = vrot.slane %v599, 1
  %v784 = vrot.slane %v600, 1
  %v785 = vrot.slane %v601, 1
  %v786 = vrot.slane %v602, 1
  %v787 = vrot.slane %v603, 1
  %v788 = vrot.slane %v604, 1
  %v789 = vrot.slane %v605, 1
  %v790 = vrot.slane %v606, 1
  %v791 = vrot.slane %v607, 1
  %v792 = vsel %vm99, %v790, %v791
  %v793 = vsel %vm99, %v789, %v790
  %v794 = vsel %vm99, %v788, %v789
  %v795 = vsel %vm99, %v787, %v788
  %v796 = vsel %vm99, %v786, %v787
  %v797 = vsel %vm99, %v785, %v786
  %v798 = vsel %vm99, %v784, %v785
  %v799 = vsel %vm99, %v783, %v784
  %v800 = vsel %vm99, %v782, %v783
  %v801 = vsel %vm99, %v781, %v782
  %v802 = vsel %vm99, %v780, %v781
  %v803 = vsel %vm99, %v779, %v780
  %v804 = vsel %vm99, %v778, %v779
  %v805 = vsel %vm99, %v777, %v778
  %v806 = vsel %vm99, %v776, %v777
  %v807 = vsel %vm99, %v775, %v776
  %v808 = vsel %vm99, %v774, %v775
  %v809 = vsel %vm99, %v773, %v774
  %v810 = vsel %vm99, %v772, %v773
  %v811 = vsel %vm99, %v791, %v772
  %v812 = vmax.f32 %v588, %v810
  %v813 = vmax.f32 %v589, %v809
  %v814 = vmax.f32 %v590, %v808
  %v815 = vmax.f32 %v591, %v807
  %v816 = vmax.f32 %v592, %v806
  %v817 = vmax.f32 %v593, %v805
  %v818 = vmax.f32 %v594, %v804
  %v819 = vmax.f32 %v595, %v803
  %v820 = vmax.f32 %v596, %v802
  %v821 = vmax.f32 %v597, %v801
  %v822 = vmax.f32 %v598, %v800
  %v823 = vmax.f32 %v599, %v799
  %v824 = vmax.f32 %v600, %v798
  %v825 = vmax.f32 %v601, %v797
  %v826 = vmax.f32 %v602, %v796
  %v827 = vmax.f32 %v603, %v795
  %v828 = vmax.f32 %v604, %v794
  %v829 = vmax.f32 %v605, %v793
  %v830 = vmax.f32 %v606, %v792
  %v831 = vmax.f32 %v607, %v811
  %v832 = vrot.slane %v588, 2
  %v833 = vrot.slane %v589, 2
  %v834 = vrot.slane %v590, 2
  %v835 = vrot.slane %v591, 2
  %v836 = vrot.slane %v592, 2
  %v837 = vrot.slane %v593, 2
  %v838 = vrot.slane %v594, 2
  %v839 = vrot.slane %v595, 2
  %v840 = vrot.slane %v596, 2
  %v841 = vrot.slane %v597, 2
  %v842 = vrot.slane %v598, 2
  %v843 = vrot.slane %v599, 2
  %v844 = vrot.slane %v600, 2
  %v845 = vrot.slane %v601, 2
  %v846 = vrot.slane %v602, 2
  %v847 = vrot.slane %v603, 2
  %v848 = vrot.slane %v604, 2
  %v849 = vrot.slane %v605, 2
  %v850 = vrot.slane %v606, 2
  %v851 = vrot.slane %v607, 2
  %v852 = vsel %vm144, %v850, %v851
  %v853 = vsel %vm144, %v849, %v850
  %v854 = vsel %vm144, %v848, %v849
  %v855 = vsel %vm144, %v847, %v848
  %v856 = vsel %vm144, %v846, %v847
  %v857 = vsel %vm144, %v845, %v846
  %v858 = vsel %vm144, %v844, %v845
  %v859 = vsel %vm144, %v843, %v844
  %v860 = vsel %vm144, %v842, %v843
  %v861 = vsel %vm144, %v841, %v842
  %v862 = vsel %vm144, %v840, %v841
  %v863 = vsel %vm144, %v839, %v840
  %v864 = vsel %vm144, %v838, %v839
  %v865 = vsel %vm144, %v837, %v838
  %v866 = vsel %vm144, %v836, %v837
  %v867 = vsel %vm144, %v835, %v836
  %v868 = vsel %vm144, %v834, %v835
  %v869 = vsel %vm144, %v833, %v834
  %v870 = vsel %vm144, %v832, %v833
  %v871 = vsel %vm144, %v851, %v832
  %v872 = vmax.f32 %v812, %v870
  %v873 = vmax.f32 %v813, %v869
  %v874 = vmax.f32 %v814, %v868
  %v875 = vmax.f32 %v815, %v867
  %v876 = vmax.f32 %v816, %v866
  %v877 = vmax.f32 %v817, %v865
  %v878 = vmax.f32 %v818, %v864
  %v879 = vmax.f32 %v819, %v863
  %v880 = vmax.f32 %v820, %v862
  %v881 = vmax.f32 %v821, %v861
  %v882 = vmax.f32 %v822, %v860
  %v883 = vmax.f32 %v823, %v859
  %v884 = vmax.f32 %v824, %v858
  %v885 = vmax.f32 %v825, %v857
  %v886 = vmax.f32 %v826, %v856
  %v887 = vmax.f32 %v827, %v855
  %v888 = vmax.f32 %v828, %v854
  %v889 = vmax.f32 %v829, %v853
  %v890 = vmax.f32 %v830, %v852
  %v891 = vmax.f32 %v831, %v871
  %v892 = vld [vmem:[%s7] sm:$0xf]
  %v893 = vld [vmem:[%s7 + $0x4] sm:$0xf]
  %v894 = vld [vmem:[%s7 + $0x8] sm:$0xf]
  %v895 = vld [vmem:[%s7 + $0xc] sm:$0xf]
  %v896 = vpack.c.bf16 %v873, %v872
  %v897 = vpack.c.bf16 %v875, %v874
  %v898 = vpack.c.bf16 %v877, %v876
  %v899 = vpack.c.bf16 %v879, %v878
  %v900 = vpack.c.bf16 %v881, %v880
  %v901 = vpack.c.bf16 %v883, %v882
  %v902 = vpack.c.bf16 %v885, %v884
  %v903 = vpack.c.bf16 %v887, %v886
  %v904 = vpack.c.bf16 %v889, %v888
  %v905 = vpack.c.bf16 %v891, %v890
  %v906 = vld [vmem:[%s8] sm:$0x1]
  %v908 = vlaneseq
  %v909 = vshrl.u32 %v908, 7
  %v910 = vsub.s32 0, %v909
  %v911 = vrot.slane %v906, %v910
  %v917 = vunpack.c.l.b16 %v892
  %v918 = vunpack.c.l.b16 %v893
  %v919 = vunpack.c.l.b16 %v894
  %v920 = vunpack.c.l.b16 %v895
  %v921 = vpack.c.b16 %v918, %v917
  %v922 = vpack.c.b16 %v920, %v919
  %v926 = vsel %vm366, %v896, 0
  %v929 = vsel %vm366, %v897, 0
  %v932 = vsel %vm366, %v898, 0
  %v935 = vsel %vm366, %v899, 0
  %v938 = vsel %vm366, %v900, 0
  %v941 = vsel %vm366, %v901, 0
  %v944 = vsel %vm366, %v902, 0
  %v947 = vsel %vm366, %v903, 0
  %v950 = vsel %vm366, %v904, 0
  %v953 = vsel %vm366, %v905, 0
  %955 = vmatprep.subr.bf16.mxu0 0
  %956 = vmatpush1.bf16.msra.mxu0 %v921
  %957 = vmatprep.subr.bf16.mxu0 0
  %958 = vmatpush1.bf16.msra.mxu0 %v922
  %959 = vmatprep.subr.bf16.mxu0 0
  %960 = vmatpush1.bf16.msra.mxu0 0
  %961 = vmatprep.subr.bf16.mxu0 0
  %962 = vmatpush1.bf16.msra.mxu0 0
  %963 = vmatprep.subr.bf16.mxu0 0
  %964 = vmatpush1.bf16.msra.mxu0 0
  %965 = vmatprep.subr.bf16.mxu0 0
  %966 = vmatpush1.bf16.msra.mxu0 0
  %967 = vmatprep.subr.bf16.mxu0 0
  %968 = vmatpush1.bf16.msra.mxu0 0
  %969 = vmatprep.subr.bf16.mxu0 0
  %970 = vmatpush1.bf16.msra.mxu0 0
  %971 = vmatprep.subr.bf16.mxu0 0
  %972 = vmatpush1.bf16.msra.mxu0 0
  %973 = vmatprep.subr.bf16.mxu0 0
  %974 = vmatpush1.bf16.msra.mxu0 0
  %975 = vmatprep.subr.bf16.mxu0 0
  %976 = vmatpush1.bf16.msra.mxu0 0
  %977 = vmatprep.subr.bf16.mxu0 0
  %978 = vmatpush1.bf16.msra.mxu0 0
  %979 = vmatprep.subr.bf16.mxu0 0
  %980 = vmatpush1.bf16.msra.mxu0 0
  %981 = vmatprep.subr.bf16.mxu0 0
  %982 = vmatpush1.bf16.msra.mxu0 0
  %983 = vmatprep.subr.bf16.mxu0 0
  %984 = vmatpush1.bf16.msra.mxu0 0
  %985 = vmatprep.subr.bf16.mxu0 0
  %986 = vmatpush1.bf16.msra.mxu0 0
  %987 = vmatprep.mubr.bf16.mxu0 0
  %988 = vmatmul.mubr.bf16.gmra.mrb[0].mxu0 %v926
  %v989 = vpop.f32.mrb[0].mxu0
  %v990 = vadd.f32 %v911, %v989
  %v991 = vpop.f32.mrb[0].mxu0
  %v992 = vpop.f32.mrb[0].mxu0
  %v993 = vadd.f32 %v911, %v992
  %v994 = vpop.f32.mrb[0].mxu0
  %995 = vmatprep.mubr.bf16.mxu0 0
  %996 = vmatmul.mubr.bf16.gmra.mrb[0].mxu0 %v929
  %v997 = vpop.f32.mrb[0].mxu0
  %v998 = vadd.f32 %v911, %v997
  %v999 = vpop.f32.mrb[0].mxu0
  %v1000 = vpop.f32.mrb[0].mxu0
  %v1001 = vadd.f32 %v911, %v1000
  %v1002 = vpop.f32.mrb[0].mxu0
  %1003 = vmatprep.mubr.bf16.mxu0 0
  %1004 = vmatmul.mubr.bf16.gmra.mrb[0].mxu0 %v932
  %v1005 = vpop.f32.mrb[0].mxu0
  %v1006 = vadd.f32 %v911, %v1005
  %v1007 = vpop.f32.mrb[0].mxu0
  %v1008 = vpop.f32.mrb[0].mxu0
  %v1009 = vadd.f32 %v911, %v1008
  %v1010 = vpop.f32.mrb[0].mxu0
  %1011 = vmatprep.mubr.bf16.mxu0 0
  %1012 = vmatmul.mubr.bf16.gmra.mrb[0].mxu0 %v935
  %v1013 = vpop.f32.mrb[0].mxu0
  %v1014 = vadd.f32 %v911, %v1013
  %v1015 = vpop.f32.mrb[0].mxu0
  %v1016 = vpop.f32.mrb[0].mxu0
  %v1017 = vadd.f32 %v911, %v1016
  %v1018 = vpop.f32.mrb[0].mxu0
  %1019 = vmatprep.mubr.bf16.mxu0 0
  %1020 = vmatmul.mubr.bf16.gmra.mrb[0].mxu0 %v938
  %v1021 = vpop.f32.mrb[0].mxu0
  %v1022 = vadd.f32 %v911, %v1021
  %v1023 = vpop.f32.mrb[0].mxu0
  %v1024 = vpop.f32.mrb[0].mxu0
  %v1025 = vadd.f32 %v911, %v1024
  %v1026 = vpop.f32.mrb[0].mxu0
  %1027 = vmatprep.mubr.bf16.mxu0 0
  %1028 = vmatmul.mubr.bf16.gmra.mrb[0].mxu0 %v941
  %v1029 = vpop.f32.mrb[0].mxu0
  %v1030 = vadd.f32 %v911, %v1029
  %v1031 = vpop.f32.mrb[0].mxu0
  %v1032 = vpop.f32.mrb[0].mxu0
  %v1033 = vadd.f32 %v911, %v1032
  %v1034 = vpop.f32.mrb[0].mxu0
  %1035 = vmatprep.mubr.bf16.mxu0 0
  %1036 = vmatmul.mubr.bf16.gmra.mrb[0].mxu0 %v944
  %v1037 = vpop.f32.mrb[0].mxu0
  %v1038 = vadd.f32 %v911, %v1037
  %v1039 = vpop.f32.mrb[0].mxu0
  %v1040 = vpop.f32.mrb[0].mxu0
  %v1041 = vadd.f32 %v911, %v1040
  %v1042 = vpop.f32.mrb[0].mxu0
  %1043 = vmatprep.mubr.bf16.mxu0 0
  %1044 = vmatmul.mubr.bf16.gmra.mrb[0].mxu0 %v947
  %v1045 = vpop.f32.mrb[0].mxu0
  %v1046 = vadd.f32 %v911, %v1045
  %v1047 = vpop.f32.mrb[0].mxu0
  %v1048 = vpop.f32.mrb[0].mxu0
  %v1049 = vadd.f32 %v911, %v1048
  %v1050 = vpop.f32.mrb[0].mxu0
  %1051 = vmatprep.mubr.bf16.mxu0 0
  %1052 = vmatmul.mubr.bf16.gmra.mrb[0].mxu0 %v950
  %v1053 = vpop.f32.mrb[0].mxu0
  %v1054 = vadd.f32 %v911, %v1053
  %v1055 = vpop.f32.mrb[0].mxu0
  %v1056 = vpop.f32.mrb[0].mxu0
  %v1057 = vadd.f32 %v911, %v1056
  %v1058 = vpop.f32.mrb[0].mxu0
  %1059 = vmatprep.mubr.bf16.mxu0 0
  %1060 = vmatmul.mubr.bf16.gmra.mrb[0].mxu0 %v953
  %v1061 = vpop.f32.mrb[0].mxu0
  %v1062 = vadd.f32 %v911, %v1061
  %v1063 = vpop.f32.mrb[0].mxu0
  %v1064 = vpop.f32.mrb[0].mxu0
  %v1065 = vadd.f32 %v911, %v1064
  %v1066 = vpop.f32.mrb[0].mxu0
  %1067 = vdwg.mxu0
  %v1068 = vtanh.pop %v990
  %v1069 = vtanh.pop %v993
  %v1070 = vtanh.pop %v998
  %v1071 = vtanh.pop %v1001
  %v1072 = vtanh.pop %v1006
  %v1073 = vtanh.pop %v1009
  %v1074 = vtanh.pop %v1014
  %v1075 = vtanh.pop %v1017
  %v1076 = vtanh.pop %v1022
  %v1077 = vtanh.pop %v1025
  %v1078 = vtanh.pop %v1030
  %v1079 = vtanh.pop %v1033
  %v1080 = vtanh.pop %v1038
  %v1081 = vtanh.pop %v1041
  %v1082 = vtanh.pop %v1046
  %v1083 = vtanh.pop %v1049
  %v1084 = vtanh.pop %v1054
  %v1085 = vtanh.pop %v1057
  %v1086 = vtanh.pop %v1062
  %v1087 = vtanh.pop %v1065
  %v1088 = vld [vmem:[%s9] sm:$0xff]
  %v1089 = vpack.c.bf16 %v1069, %v1068
  %v1090 = vpack.c.bf16 %v1071, %v1070
  %v1091 = vpack.c.bf16 %v1073, %v1072
  %v1092 = vpack.c.bf16 %v1075, %v1074
  %v1093 = vpack.c.bf16 %v1077, %v1076
  %v1094 = vpack.c.bf16 %v1079, %v1078
  %v1095 = vpack.c.bf16 %v1081, %v1080
  %v1096 = vpack.c.bf16 %v1083, %v1082
  %v1097 = vpack.c.bf16 %v1085, %v1084
  %v1098 = vpack.c.bf16 %v1087, %v1086
  %v1100 = vunpack.c.l.b16 %v1088
  %v1101 = vunpack.c.h.b16 %v1088
  %v1102 = vpack.c.b16 %v1100, %v1100
  %v1103 = vpack.c.b16 %v1101, %v1101
  %v1106 = vsel %vm366, %v1103, 0
  %1108 = vmatprep.subr.bf16.mxu0 0
  %1109 = vmatpush1.bf16.msra.mxu0 %v1089
  %1110 = vmatprep.subr.bf16.mxu0 0
  %1111 = vmatpush1.bf16.msra.mxu0 %v1090
  %1112 = vmatprep.subr.bf16.mxu0 0
  %1113 = vmatpush1.bf16.msra.mxu0 %v1091
  %1114 = vmatprep.subr.bf16.mxu0 0
  %1115 = vmatpush1.bf16.msra.mxu0 %v1092
  %1116 = vmatprep.subr.bf16.mxu0 0
  %1117 = vmatpush1.bf16.msra.mxu0 %v1093
  %1118 = vmatprep.subr.bf16.mxu0 0
  %1119 = vmatpush1.bf16.msra.mxu0 %v1094
  %1120 = vmatprep.subr.bf16.mxu0 0
  %1121 = vmatpush1.bf16.msra.mxu0 %v1095
  %1122 = vmatprep.subr.bf16.mxu0 0
  %1123 = vmatpush1.bf16.msra.mxu0 %v1096
  %1124 = vmatprep.subr.bf16.mxu0 0
  %1125 = vmatpush1.bf16.msra.mxu0 %v1097
  %1126 = vmatprep.subr.bf16.mxu0 0
  %1127 = vmatpush1.bf16.msra.mxu0 %v1098
  %1128 = vmatprep.subr.bf16.mxu0 0
  %1129 = vmatpush1.bf16.msra.mxu0 0
  %1130 = vmatprep.subr.bf16.mxu0 0
  %1131 = vmatpush1.bf16.msra.mxu0 0
  %1132 = vmatprep.subr.bf16.mxu0 0
  %1133 = vmatpush1.bf16.msra.mxu0 0
  %1134 = vmatprep.subr.bf16.mxu0 0
  %1135 = vmatpush1.bf16.msra.mxu0 0
  %1136 = vmatprep.subr.bf16.mxu0 0
  %1137 = vmatpush1.bf16.msra.mxu0 0
  %1138 = vmatprep.subr.bf16.mxu0 0
  %1139 = vmatpush1.bf16.msra.mxu0 0
  %1140 = vmatprep.mubr.bf16.mxu0 %v1106
  %1141 = vmatmul.mubr.bf16.gmra.mrb[0].mxu0 %v1102
  %v1142 = vpop.f32.mrb[0].mxu0
  %v1143 = vadd.f32 0.0, %v1142
  %v1144 = vpop.f32.mrb[0].mxu0
  %v1145 = vpop.f32.mrb[0].mxu0
  %v1146 = vpop.f32.mrb[0].mxu0
  %1147 = vdwg.mxu0
  %v1148 = vmul.f32 %v1143, %v769
  %s1149 = sld [smem:[#allocation2]]
  %v1150 = vstv %s1149
  %v1151 = vadd.f32 %v1148, %v1150
  %v1152 = vtanh.pop %v1151
  %v1153 = vld [vmem:[%s11] sm:$0xf]
  %v1154 = vld [vmem:[%s11 + $0x4] sm:$0xf]
  %v1155 = vld [vmem:[%s11 + $0x8] sm:$0xf]
  %v1156 = vld [vmem:[%s11 + $0xc] sm:$0xf]
  %v1157 = vpack.c.bf16 %v1152, %v1152
  %v1158 = vld [vmem:[%s12] sm:$0x1]
  %v1160 = vlaneseq
  %v1161 = vshrl.u32 %v1160, 7
  %v1162 = vsub.s32 0, %v1161
  %v1163 = vrot.slane %v1158, %v1162
  %v1169 = vunpack.c.l.b16 %v1153
  %v1170 = vunpack.c.l.b16 %v1154
  %v1171 = vunpack.c.l.b16 %v1155
  %v1172 = vunpack.c.l.b16 %v1156
  %v1173 = vpack.c.b16 %v1170, %v1169
  %v1174 = vpack.c.b16 %v1172, %v1171
  %v1178 = vsel %vm366, %v1157, 0
  %1180 = vmatprep.subr.bf16.mxu0 0
  %1181 = vmatpush1.bf16.msra.mxu0 %v1173
  %1182 = vmatprep.subr.bf16.mxu0 0
  %1183 = vmatpush1.bf16.msra.mxu0 %v1174
  %1184 = vmatprep.subr.bf16.mxu0 0
  %1185 = vmatpush1.bf16.msra.mxu0 0
  %1186 = vmatprep.subr.bf16.mxu0 0
  %1187 = vmatpush1.bf16.msra.mxu0 0
  %1188 = vmatprep.subr.bf16.mxu0 0
  %1189 = vmatpush1.bf16.msra.mxu0 0
  %1190 = vmatprep.subr.bf16.mxu0 0
  %1191 = vmatpush1.bf16.msra.mxu0 0
  %1192 = vmatprep.subr.bf16.mxu0 0
  %1193 = vmatpush1.bf16.msra.mxu0 0
  %1194 = vmatprep.subr.bf16.mxu0 0
  %1195 = vmatpush1.bf16.msra.mxu0 0
  %1196 = vmatprep.subr.bf16.mxu0 0
  %1197 = vmatpush1.bf16.msra.mxu0 0
  %1198 = vmatprep.subr.bf16.mxu0 0
  %1199 = vmatpush1.bf16.msra.mxu0 0
  %1200 = vmatprep.subr.bf16.mxu0 0
  %1201 = vmatpush1.bf16.msra.mxu0 0
  %1202 = vmatprep.subr.bf16.mxu0 0
  %1203 = vmatpush1.bf16.msra.mxu0 0
  %1204 = vmatprep.subr.bf16.mxu0 0
  %1205 = vmatpush1.bf16.msra.mxu0 0
  %1206 = vmatprep.subr.bf16.mxu0 0
  %1207 = vmatpush1.bf16.msra.mxu0 0
  %1208 = vmatprep.subr.bf16.mxu0 0
  %1209 = vmatpush1.bf16.msra.mxu0 0
  %1210 = vmatprep.subr.bf16.mxu0 0
  %1211 = vmatpush1.bf16.msra.mxu0 0
  %1212 = vmatprep.mubr.bf16.mxu0 0
  %1213 = vmatmul.mubr.bf16.gmra.mrb[0].mxu0 %v1178
  %v1214 = vpop.f32.mrb[0].mxu0
  %v1215 = vadd.f32 %v1163, %v1214
  %v1216 = vpop.f32.mrb[0].mxu0
  %v1217 = vpop.f32.mrb[0].mxu0
  %v1218 = vpop.f32.mrb[0].mxu0
  %1219 = vdwg.mxu0
  %v1220 = vtanh.pop %v1215
  %v1221 = vld [vmem:[%s13] sm:$0xf]
  %v1222 = vld [vmem:[%s13 + $0x4] sm:$0xf]
  %v1223 = vld [vmem:[%s13 + $0x8] sm:$0xf]
  %v1224 = vld [vmem:[%s13 + $0xc] sm:$0xf]
  %v1225 = vpack.c.bf16 %v1220, %v1220
  %s1226 = sld [smem:[#allocation3]]
  %v1227 = vstv %s1226
  %v1232 = vunpack.c.l.b16 %v1221
  %v1233 = vunpack.c.l.b16 %v1222
  %v1234 = vunpack.c.l.b16 %v1223
  %v1235 = vunpack.c.l.b16 %v1224
  %v1236 = vpack.c.b16 %v1233, %v1232
  %v1237 = vpack.c.b16 %v1235, %v1234
  %v1241 = vsel %vm366, %v1225, 0
  %1243 = vmatprep.subr.bf16.mxu0 0
  %1244 = vmatpush1.bf16.msra.mxu0 %v1236
  %1245 = vmatprep.subr.bf16.mxu0 0
  %1246 = vmatpush1.bf16.msra.mxu0 %v1237
  %1247 = vmatprep.subr.bf16.mxu0 0
  %1248 = vmatpush1.bf16.msra.mxu0 0
  %1249 = vmatprep.subr.bf16.mxu0 0
  %1250 = vmatpush1.bf16.msra.mxu0 0
  %1251 = vmatprep.subr.bf16.mxu0 0
  %1252 = vmatpush1.bf16.msra.mxu0 0
  %1253 = vmatprep.subr.bf16.mxu0 0
  %1254 = vmatpush1.bf16.msra.mxu0 0
  %1255 = vmatprep.subr.bf16.mxu0 0
  %1256 = vmatpush1.bf16.msra.mxu0 0
  %1257 = vmatprep.subr.bf16.mxu0 0
  %1258 = vmatpush1.bf16.msra.mxu0 0
  %1259 = vmatprep.subr.bf16.mxu0 0
  %1260 = vmatpush1.bf16.msra.mxu0 0
  %1261 = vmatprep.subr.bf16.mxu0 0
  %1262 = vmatpush1.bf16.msra.mxu0 0
  %1263 = vmatprep.subr.bf16.mxu0 0
  %1264 = vmatpush1.bf16.msra.mxu0 0
  %1265 = vmatprep.subr.bf16.mxu0 0
  %1266 = vmatpush1.bf16.msra.mxu0 0
  %1267 = vmatprep.subr.bf16.mxu0 0
  %1268 = vmatpush1.bf16.msra.mxu0 0
  %1269 = vmatprep.subr.bf16.mxu0 0
  %1270 = vmatpush1.bf16.msra.mxu0 0
  %1271 = vmatprep.subr.bf16.mxu0 0
  %1272 = vmatpush1.bf16.msra.mxu0 0
  %1273 = vmatprep.subr.bf16.mxu0 0
  %1274 = vmatpush1.bf16.msra.mxu0 0
  %1275 = vmatprep.mubr.bf16.mxu0 0
  %1276 = vmatmul.mubr.bf16.gmra.mrb[0].mxu0 %v1241
  %v1277 = vpop.f32.mrb[0].mxu0
  %v1278 = vadd.f32 %v1227, %v1277
  %v1279 = vpop.f32.mrb[0].mxu0
  %v1280 = vpop.f32.mrb[0].mxu0
  %v1281 = vpop.f32.mrb[0].mxu0
  %1282 = vdwg.mxu0
  %v1283 = vtanh.pop %v1278
  %vm1284 = vcmask 7168
  %1285 = vst.msk [vmem:[%s15] sm:$0xff] %vm1284, %v1283
  // Predicated region
  $region62: #{distributed_model_forward.1} parent=0 // pred_check
    _
  $region63: #{distributed_model_forward.1} parent=0 // pred_check_branch
    %1287 = sbr.rel (0) target = $region65
  $region64: #{distributed_model_forward.1} parent=0 // pred_region
    _
  $region65: #{distributed_model_forward.1} parent=0 // pred_fallthru
    _
  // Predicated region
  $region66: #{distributed_model_forward.1} parent=0 // pred_check
    _
  $region67: #{distributed_model_forward.1} parent=0 // pred_check_branch
    %1289 = sbr.rel (0) target = $region69
  $region68: #{distributed_model_forward.1} parent=0 // pred_region
    _
  $region69: #{distributed_model_forward.1} parent=0 // pred_fallthru
    _

</llo_original>
